<compile_context>
chip_gen: v6e
topology: v6e:2x2x1
jax: 0.10.0
libtpu: 0.0.40
codegen_flags: <defaults>
</compile_context>

<pallas_src>
import functools

import jax
import jax.numpy as jnp
from jax.experimental import pallas as pl
from jax.experimental.pallas import tpu as pltpu


# ---------------------------------------------------------------------------
# Kernel
# ---------------------------------------------------------------------------
def _moving_avg_kernel(x_ref, o_ref, xp_ref, *, kernel_size, pad, seq_len, out_len):
    """x_ref: (bb, L, C) input block.  o_ref: (bb, out_len, C).
    xp_ref: (bb, L_pad, C) VMEM scratch holding the replicate-padded slab."""
    bb, _, C = x_ref.shape

    # --- Fused replicate padding (no HBM-materialized padded copy) ----------
    xp_ref[:, pad:pad + seq_len, :] = x_ref[...]
    if pad > 0:
        first = x_ref[:, 0:1, :]
        last = x_ref[:, seq_len - 1:seq_len, :]
        xp_ref[:, 0:pad, :] = jnp.broadcast_to(first, (bb, pad, C))
        xp_ref[:, pad + seq_len:pad + seq_len + pad, :] = jnp.broadcast_to(
            last, (bb, pad, C))

    # --- Sliding-window sum: K contiguous sublane-slice loads from the ref --
    # (static unroll; stride is compiled out to 1 on this path)
    acc = xp_ref[:, 0:out_len, :].astype(jnp.float32)
    for k in range(1, kernel_size):
        acc = acc + xp_ref[:, k:k + out_len, :].astype(jnp.float32)

    o_ref[...] = (acc * (1.0 / float(kernel_size))).astype(o_ref.dtype)


# ---------------------------------------------------------------------------
# Wrapper
# ---------------------------------------------------------------------------
def _pick_block_b(B, padded_row_bytes, cap_bytes=4 << 20, target_steps=8):
    """Largest divisor of B with per-block footprint <= cap and enough grid
    steps to keep the BlockSpec pipeline busy (and both v7x cores fed)."""
    best = 1
    for bb in range(1, B + 1):
        if B % bb:
            continue
        if bb * padded_row_bytes > cap_bytes:
            continue
        if B // bb < min(target_steps, B):
            continue
        best = max(best, bb)
    return best


def moving_avg(x, kernel_size, stride=1):
    """x: (B, L, C).  Returns (B, L_out, C) moving average over the time axis,
    with replicate padding of (kernel_size-1)//2 rows at each end."""
    B, L, C = x.shape
    pad = (kernel_size - 1) // 2
    L_pad = L + 2 * pad
    out_len = (L_pad - kernel_size) // stride + 1
    if out_len <= 0:
        raise ValueError(
            f"Degenerate shapes: L={L}, kernel_size={kernel_size} give out_len={out_len}")

    if stride != 1:
        # TODO(synk): strided AvgPool1d path not implemented in the Pallas
        # kernel (series_decomp always uses stride=1); pure-JAX fallback.
        return reference(x, kernel_size, stride)

    itemsize = x.dtype.itemsize
    block_b = _pick_block_b(B, L_pad * C * itemsize)
    grid = B // block_b

    # Explicit VMEM budget: 2x double-buffered (in + out) + the padded scratch.
    in_bytes = block_b * L * C * itemsize
    out_bytes = block_b * out_len * C * itemsize
    scratch_bytes = block_b * L_pad * C * itemsize
    vmem_need = 2 * (in_bytes + out_bytes) + scratch_bytes
    vmem_limit = int(min(max(2 * vmem_need, 16 << 20), 32 << 20))

    kernel = functools.partial(
        _moving_avg_kernel,
        kernel_size=kernel_size, pad=pad, seq_len=L, out_len=out_len)

    return pl.pallas_call(
        kernel,
        out_shape=jax.ShapeDtypeStruct((B, out_len, C), x.dtype),
        grid_spec=pltpu.PrefetchScalarGridSpec(
            num_scalar_prefetch=0,
            grid=(grid,),
            in_specs=[pl.BlockSpec((block_b, L, C), lambda i: (i, 0, 0))],
            out_specs=pl.BlockSpec((block_b, out_len, C), lambda i: (i, 0, 0)),
            scratch_shapes=[pltpu.VMEM((block_b, L_pad, C), x.dtype)],
        ),
        compiler_params=pltpu.CompilerParams(
            dimension_semantics=("parallel",),
            vmem_limit_bytes=vmem_limit),
        cost_estimate=pl.CostEstimate(
            flops=B * out_len * C * kernel_size,
            transcendentals=0,
            bytes_accessed=(B * L * C + B * out_len * C) * itemsize),
    )(x)


# ---------------------------------------------------------------------------
# Pure-JAX reference (mirrors the PyTorch module exactly)
# ---------------------------------------------------------------------------
def reference(x, kernel_size, stride=1):
    pad = (kernel_size - 1) // 2
    front = jnp.repeat(x[:, :1, :], pad, axis=1)
    end = jnp.repeat(x[:, -1:, :], pad, axis=1)
    xp = jnp.concatenate([front, x, end], axis=1)
    s = jax.lax.reduce_window(
        xp, 0.0, jax.lax.add,
        window_dimensions=(1, kernel_size, 1),
        window_strides=(1, stride, 1),
        padding="VALID")
    return s / kernel_size


# ---------------------------------------------------------------------------
# Main
# ---------------------------------------------------------------------------
if __name__ == "__main__":
    key = jax.random.PRNGKey(0)

    configs = [
        # (B, L, C, kernel_size) — lane-dense C; typical series_decomp K values
        (4, 24, 128, 5),
        (4, 96, 128, 25),
    ]

    for (B, L, C, K) in configs:
        key, sub = jax.random.split(key)
        x = jax.random.normal(sub, (B, L, C), jnp.float32)

        out = jax.block_until_ready(moving_avg(x, K, 1))
        ref = jax.block_until_ready(reference(x, K, 1))

        assert out.shape == ref.shape, (out.shape, ref.shape)
        assert out.shape == (B, L, C), out.shape  # odd K, stride 1 -> same length
        assert jnp.allclose(out, ref, atol=1e-5, rtol=1e-5), \
            f"mismatch vs reference for K={K}"

    print("KERNEL_OK")
</pallas_src>

<mosaic_0001>
module attributes {stable_mosaic.version = 11 : i64} {
  func.func @_moving_avg_kernel(%arg0: i32, %arg1: memref<1x24x128xf32, #tpu.memory_space<vmem>>, %arg2: memref<1x24x128xf32, #tpu.memory_space<vmem>>, %arg3: memref<1x28x128xf32, #tpu.memory_space<vmem>>) attributes {dimension_semantics = [#tpu.dimension_semantics<parallel>], iteration_bounds = array<i64: 4>, scalar_prefetch = 0 : i64, scratch_operands = 1 : i64, tpu.core_type = #tpu.core_type<tc>, window_params = [{transform_indices = @transform_0, window_bounds = array<i64: 1, 24, 128>}, {transform_indices = @transform_1, window_bounds = array<i64: 1, 24, 128>}]} {
    %c0 = arith.constant 0 : index
    %c0_0 = arith.constant 0 : index
    %c0_1 = arith.constant 0 : index
    %0 = vector.load %arg1[%c0, %c0_0, %c0_1] : memref<1x24x128xf32, #tpu.memory_space<vmem>>, vector<1x24x128xf32>
    %c0_2 = arith.constant 0 : index
    %c2 = arith.constant 2 : index
    %c0_3 = arith.constant 0 : index
    %1 = vector.load %arg3[%c0_2, %c2, %c0_3] : memref<1x28x128xf32, #tpu.memory_space<vmem>>, vector<1x24x128xf32>
    tpu.vector_store %arg3[%c0_2, %c2, %c0_3], %0 {strides = array<i32>} : memref<1x28x128xf32, #tpu.memory_space<vmem>>, vector<1x24x128xf32>,
    %c0_4 = arith.constant 0 : index
    %c0_5 = arith.constant 0 : index
    %c0_6 = arith.constant 0 : index
    %2 = vector.load %arg1[%c0_4, %c0_5, %c0_6] : memref<1x24x128xf32, #tpu.memory_space<vmem>>, vector<1x1x128xf32>
    %c0_7 = arith.constant 0 : index
    %c23 = arith.constant 23 : index
    %c0_8 = arith.constant 0 : index
    %3 = vector.load %arg1[%c0_7, %c23, %c0_8] : memref<1x24x128xf32, #tpu.memory_space<vmem>>, vector<1x1x128xf32>
    %4 = vector.shape_cast %2 : vector<1x1x128xf32> to vector<1x1x128xf32>
    %5 = vector.broadcast %4 : vector<1x1x128xf32> to vector<1x2x128xf32>
    %c0_9 = arith.constant 0 : index
    %c0_10 = arith.constant 0 : index
    %c0_11 = arith.constant 0 : index
    %6 = vector.load %arg3[%c0_9, %c0_10, %c0_11] : memref<1x28x128xf32, #tpu.memory_space<vmem>>, vector<1x2x128xf32>
    tpu.vector_store %arg3[%c0_9, %c0_10, %c0_11], %5 {strides = array<i32>} : memref<1x28x128xf32, #tpu.memory_space<vmem>>, vector<1x2x128xf32>,
    %7 = vector.shape_cast %3 : vector<1x1x128xf32> to vector<1x1x128xf32>
    %8 = vector.broadcast %7 : vector<1x1x128xf32> to vector<1x2x128xf32>
    %c0_12 = arith.constant 0 : index
    %c26 = arith.constant 26 : index
    %c0_13 = arith.constant 0 : index
    %9 = vector.load %arg3[%c0_12, %c26, %c0_13] : memref<1x28x128xf32, #tpu.memory_space<vmem>>, vector<1x2x128xf32>
    tpu.vector_store %arg3[%c0_12, %c26, %c0_13], %8 {strides = array<i32>} : memref<1x28x128xf32, #tpu.memory_space<vmem>>, vector<1x2x128xf32>,
    %c0_14 = arith.constant 0 : index
    %c0_15 = arith.constant 0 : index
    %c0_16 = arith.constant 0 : index
    %10 = vector.load %arg3[%c0_14, %c0_15, %c0_16] : memref<1x28x128xf32, #tpu.memory_space<vmem>>, vector<1x24x128xf32>
    %c0_17 = arith.constant 0 : index
    %c1 = arith.constant 1 : index
    %c0_18 = arith.constant 0 : index
    %11 = vector.load %arg3[%c0_17, %c1, %c0_18] : memref<1x28x128xf32, #tpu.memory_space<vmem>>, vector<1x24x128xf32>
    %12 = arith.addf %10, %11 : vector<1x24x128xf32>
    %c0_19 = arith.constant 0 : index
    %c2_20 = arith.constant 2 : index
    %c0_21 = arith.constant 0 : index
    %13 = vector.load %arg3[%c0_19, %c2_20, %c0_21] : memref<1x28x128xf32, #tpu.memory_space<vmem>>, vector<1x24x128xf32>
    %14 = arith.addf %12, %13 : vector<1x24x128xf32>
    %c0_22 = arith.constant 0 : index
    %c3 = arith.constant 3 : index
    %c0_23 = arith.constant 0 : index
    %15 = vector.load %arg3[%c0_22, %c3, %c0_23] : memref<1x28x128xf32, #tpu.memory_space<vmem>>, vector<1x24x128xf32>
    %16 = arith.addf %14, %15 : vector<1x24x128xf32>
    %c0_24 = arith.constant 0 : index
    %c4 = arith.constant 4 : index
    %c0_25 = arith.constant 0 : index
    %17 = vector.load %arg3[%c0_24, %c4, %c0_25] : memref<1x28x128xf32, #tpu.memory_space<vmem>>, vector<1x24x128xf32>
    %18 = arith.addf %16, %17 : vector<1x24x128xf32>
    %cst = arith.constant 2.000000e-01 : f32
    %19 = vector.broadcast %cst : f32 to vector<1x24x128xf32>
    %20 = arith.mulf %18, %19 : vector<1x24x128xf32>
    %c0_26 = arith.constant 0 : index
    %c0_27 = arith.constant 0 : index
    %c0_28 = arith.constant 0 : index
    %21 = vector.load %arg2[%c0_26, %c0_27, %c0_28] : memref<1x24x128xf32, #tpu.memory_space<vmem>>, vector<1x24x128xf32>
    tpu.vector_store %arg2[%c0_26, %c0_27, %c0_28], %20 {strides = array<i32>} : memref<1x24x128xf32, #tpu.memory_space<vmem>>, vector<1x24x128xf32>,
    return
  }
  func.func @transform_0(%arg0: i32) -> (i32, i32, i32) {
    %c0_i32 = arith.constant 0 : i32
    %c0_i32_0 = arith.constant 0 : i32
    %c0_i32_1 = arith.constant 0 : i32
    return %arg0, %c0_i32, %c0_i32_0 : i32, i32, i32
  }
  func.func @transform_1(%arg0: i32) -> (i32, i32, i32) {
    %c0_i32 = arith.constant 0 : i32
    %c0_i32_0 = arith.constant 0 : i32
    %c0_i32_1 = arith.constant 0 : i32
    return %arg0, %c0_i32, %c0_i32_0 : i32, i32, i32
  }
}

</mosaic_0001>

<llo_original>
// kernel: tpu_custom_call.1
$region0: #{tpu_custom_call.1}
  #allocation0 [shape = 'u32[]', space=smem, size = 0x4, offset = 0x4, fixed_abs, tag = 'smem constant byte address 0x4 - core index']
  #allocation1 [shape = 'u32[144,128]{1,0:T(1,128)}', space=vmem, size = 0x12000, scoped, tag = 'internal scratch']
  #allocation2 [shape = 'f32[1,28,128]{2,1,0:T(8,128)}', space=vmem, size = 0x4000, scoped, tag = 'scratch operand']
  %s0 = inlined_call_operand.hbm [shape: f32[4,24,128], index: 0, kind: input, shape index: {}]
  %s1 = inlined_call_operand.hbm [shape: f32[4,24,128], index: 1, kind: output, shape index: {}]
  %s2 = sld [smem:[#allocation0]]
  $region41: #{tpu_custom_call.1} parent=0
    _
  %s4 = ssub.s32 1, %s2
  %s5 = scalar_select 0, %s4, %s2
  $region1: #{tpu_custom_call.1} parent=0
    #allocation3 [shape = 'u8[24576]{0}', space=vmem, size = 0x6000, scoped, tag = 'input window, operand 0']
    #allocation4 [shape = 's32[2]{0}', space=sflag, size = 0x8, scoped, tag = 'scoped memory for tpu_custom_call.1']
    #allocation5 [shape = 's32[2]{0}', space=sflag, size = 0x8, scoped, tag = 'scoped memory for tpu_custom_call.1']
    #allocation6 [shape = 'u8[24576]{0}', space=vmem, size = 0x6000, scoped, tag = 'output window, operand 0']
    %6 = vsyncpa [#allocation4], 0
    %s7 = scalar_lea.sflag [#allocation4], 1
    %8 = vsyncpa %s7, 0
    %9 = vsyncpa [#allocation5], 0
    %s10 = scalar_lea.sflag [#allocation5], 1
    %11 = vsyncpa %s10, 0
    loop: start=0, step=1, limit=6
    $region2: #{tpu_custom_call.1} parent=1 // loop_pre_header
      _
    $region3: #{tpu_custom_call.1} parent=1 // loop_header
      %s13 = sphi 0, %s17
      %p14 = scmp.ge.s32.totalorder %s13, 6
      %s23 = sphi 0, %s25
      %s26 = sphi 0, %s23
      %s27 = sphi 0, %s26
      %s43 = sphi 0, %s27
      %s49 = sphi 0, %s51
      %s52 = sphi 0, %s49
      %s53 = sphi 0, %s52
      %s69 = sphi 0, %s53
    $region4: #{tpu_custom_call.1} parent=1 // loop_header_branch
      %16 = sbr.rel (%p14) target = $region8
    $region5: #{tpu_custom_call.1} parent=1 // loop_body
      %s18 = ssub.s32 %s13, 1
      %s19 = ssub.s32 %s13, 2
      %s20 = sadd.s32 %s13, 1
      %s21 = ssub.s32 %s13, %s20
      %p22 = scmp.eq.s32.totalorder %s21, 0
      %s24 = sadd.s32 %s23, 1
      %s25 = scalar_select %p22, %s23, %s24
      %p28 = pneg %p22
      %p29 = scmp.eq.s32.totalorder %s13, 3
      %p30 = por %p28, %p29
      %p31 = scmp.ne.s32.totalorder %s23, %s26
      %p32 = scmp.eq.s32.totalorder %s13, 0
      %p33 = por %p31, %p32
      %p34 = scmp.ne.s32.totalorder %s23, %s26
      %p35 = scmp.eq.s32.totalorder %s18, 3
      %p36 = por %p34, %p35
      %p37 = scmp.ne.s32.totalorder %s26, %s27
      %p38 = scmp.eq.s32.totalorder %s18, 0
      %p39 = por %p37, %p38
      %p40 = scmp.ne.s32.totalorder %s26, %s27
      %p41 = scmp.eq.s32.totalorder %s19, 3
      %p42 = por %p40, %p41
      %p44 = scmp.ne.s32.totalorder %s27, %s43
      %p45 = scmp.eq.s32.totalorder %s19, 0
      %p46 = por %p44, %p45
      %s47 = ssub.s32 %s13, %s20
      %p48 = scmp.eq.s32.totalorder %s47, 0
      %s50 = sadd.s32 %s49, 1
      %s51 = scalar_select %p48, %s49, %s50
      %p54 = pneg %p48
      %p55 = scmp.eq.s32.totalorder %s13, 3
      %p56 = por %p54, %p55
      %p57 = scmp.ne.s32.totalorder %s49, %s52
      %p58 = scmp.eq.s32.totalorder %s13, 0
      %p59 = por %p57, %p58
      %p60 = scmp.ne.s32.totalorder %s49, %s52
      %p61 = scmp.eq.s32.totalorder %s18, 3
      %p62 = por %p60, %p61
      %p63 = scmp.ne.s32.totalorder %s52, %s53
      %p64 = scmp.eq.s32.totalorder %s18, 0
      %p65 = por %p63, %p64
      %p66 = scmp.ne.s32.totalorder %s52, %s53
      %p67 = scmp.eq.s32.totalorder %s19, 3
      %p68 = por %p66, %p67
      %p70 = scmp.ne.s32.totalorder %s53, %s69
      %p71 = scmp.eq.s32.totalorder %s19, 0
      %p72 = por %p70, %p71
      %p73 = scmp.le.s32.totalorder 1, %s13
      %p74 = scmp.lt.s32.totalorder %s13, 5
      %p75 = pnand %p73, %p74
      %p76 = pneg %p75
      // Predicated region
      $region9: #{tpu_custom_call.1} parent=5 // pred_check
        _
      $region10: #{tpu_custom_call.1} parent=5 // pred_check_branch
        %78 = sbr.rel (%p75) target = $region12
      $region11: #{tpu_custom_call.1} parent=5 // pred_region
        %s79 = ssub.s32 %s13, 1
      $region12: #{tpu_custom_call.1} parent=5 // pred_fallthru
        _
      %p80 = scmp.lt.s32.totalorder %s13, 4
      // Predicated region
      $region13: #{tpu_custom_call.1} parent=5 // pred_check
        %p81 = pneg %p80
      $region14: #{tpu_custom_call.1} parent=5 // pred_check_branch
        %83 = sbr.rel (%p81) target = $region16
      $region15: #{tpu_custom_call.1} parent=5 // pred_region
        // Predicated region
        $region17: #{tpu_custom_call.1} parent=15 // pred_check
          %p84 = pneg %p33
        $region18: #{tpu_custom_call.1} parent=15 // pred_check_branch
          %86 = sbr.rel (%p84) target = $region20
        $region19: #{tpu_custom_call.1} parent=15 // pred_region
          %s87 = sand.u32 %s23, 1
          %s88 = scalar_lea.sflag [#allocation4], %s87
          %s89 = sand.u32 %s23, 1
          %s90 = smul.addr %s89, 24
          %s91 = scalar_lea.vmem [#allocation3], %s90
          %s93 = ssub.s32 384, 384
          %94 = vsyncadd %s88, %s93
          %s95 = smul.addr %s13, 3
          %s96 = smul.addr %s95, 128
          %s97 = scalar_lea.hbm %s0, %s96
          %s98 = sshll.u32 %s91, 4
          %s99 = int_to_ptr.vmem [resolvable:$true] %s98
          %104 = dma.hbm_to_vmem [thread:$0]  %s97, 384, %s99, %s88, 128, 128, 8
        $region20: #{tpu_custom_call.1} parent=15 // pred_fallthru
          _
      $region16: #{tpu_custom_call.1} parent=5 // pred_fallthru
        _
      %p105 = scmp.le.s32.totalorder 1, %s13
      %p106 = scmp.lt.s32.totalorder %s13, 5
      %p107 = pnand %p105, %p106
      %p108 = pneg %p107
      // Predicated region
      $region21: #{tpu_custom_call.1} parent=5 // pred_check
        _
      $region22: #{tpu_custom_call.1} parent=5 // pred_check_branch
        %110 = sbr.rel (%p107) target = $region24
      $region23: #{tpu_custom_call.1} parent=5 // pred_region
        %s111 = ssub.s32 %s13, 1
        %s112 = sand.u32 %s26, 1
        %s113 = scalar_lea.sflag [#allocation4], %s112
        %s114 = sand.u32 %s26, 1
        %s115 = smul.addr %s114, 24
        %s116 = scalar_lea.vmem [#allocation3], %s115
        // Predicated region
        $region25: #{tpu_custom_call.1} parent=23 // pred_check
          %p117 = pneg %p39
        $region26: #{tpu_custom_call.1} parent=23 // pred_check_branch
          %119 = sbr.rel (%p117) target = $region28
        $region27: #{tpu_custom_call.1} parent=23 // pred_region
          %120 = dma.done %s113, 384
        $region28: #{tpu_custom_call.1} parent=23 // pred_fallthru
          _
        %s121 = sand.u32 %s26, 1
        %s122 = scalar_lea.sflag [#allocation4], %s121
        %s123 = sand.u32 %s26, 1
        %s124 = smul.addr %s123, 24
        %s125 = scalar_lea.vmem [#allocation3], %s124
        %p126 = pneg %p39
        %p127 = pneg %p36
        %p128 = pneg %p65
        %p129 = pneg %p62
        %s130 = sand.u32 %s52, 1
        %s131 = scalar_lea.sflag [#allocation5], %s130
        %s132 = sand.u32 %s52, 1
        %s133 = smul.addr %s132, 24
        %s134 = scalar_lea.vmem [#allocation6], %s133
        %v135 = vld [vmem:[%s116] sm:$0xff]
        %v136 = vld [vmem:[%s116 + $0x8] sm:$0xff]
        %v137 = vld [vmem:[%s116 + $0x10] sm:$0xff]
        %138 = vst [vmem:[#allocation2 + $0x2] sm:$0xff] %v135
        %139 = vst [vmem:[#allocation2 + $0xa] sm:$0xff] %v136
        %140 = vst [vmem:[#allocation2 + $0x12] sm:$0xff] %v137
        %v141 = vld [vmem:[%s116] sm:$0x1]
        %v142 = vld [vmem:[%s116 + $0x17] sm:$0x1]
        %v143 = vlaneseq
        %v144 = vshrl.u32 %v143, 7
        %v145 = vsub.s32 0, %v144
        %v146 = vrot.slane %v141, %v145
        %147 = vst [vmem:[#allocation2] sm:$0x3] %v146
        %v148 = vlaneseq
        %v149 = vshrl.u32 %v148, 7
        %v150 = vsub.s32 0, %v149
        %v151 = vrot.slane %v142, %v150
        %152 = vst [vmem:[#allocation2 + $0x1a] sm:$0x3] %v151
        %v153 = vld [vmem:[#allocation2] sm:$0xff]
        %v154 = vld [vmem:[#allocation2 + $0x8] sm:$0xff]
        %v155 = vld [vmem:[#allocation2 + $0x10] sm:$0xff]
        %v156 = vld [vmem:[#allocation2 + $0x1] sm:$0xff]
        %v157 = vld [vmem:[#allocation2 + $0x9] sm:$0xff]
        %v158 = vld [vmem:[#allocation2 + $0x11] sm:$0xff]
        %v159 = vadd.f32 %v153, %v156
        %v160 = vadd.f32 %v154, %v157
        %v161 = vadd.f32 %v155, %v158
        %v162 = vld [vmem:[#allocation2 + $0x2] sm:$0xff]
        %v163 = vld [vmem:[#allocation2 + $0xa] sm:$0xff]
        %v164 = vld [vmem:[#allocation2 + $0x12] sm:$0xff]
        %v165 = vadd.f32 %v159, %v162
        %v166 = vadd.f32 %v160, %v163
        %v167 = vadd.f32 %v161, %v164
        %v168 = vld [vmem:[#allocation2 + $0x3] sm:$0xff]
        %v169 = vld [vmem:[#allocation2 + $0xb] sm:$0xff]
        %v170 = vld [vmem:[#allocation2 + $0x13] sm:$0xff]
        %v171 = vadd.f32 %v165, %v168
        %v172 = vadd.f32 %v166, %v169
        %v173 = vadd.f32 %v167, %v170
        %v174 = vld [vmem:[#allocation2 + $0x4] sm:$0xff]
        %v175 = vld [vmem:[#allocation2 + $0xc] sm:$0xff]
        %v176 = vld [vmem:[#allocation2 + $0x14] sm:$0xff]
        %v177 = vadd.f32 %v171, %v174
        %v178 = vadd.f32 %v172, %v175
        %v179 = vadd.f32 %v173, %v176
        %v180 = vmul.f32 %v177, 0.2
        %v181 = vmul.f32 %v178, 0.2
        %v182 = vmul.f32 %v179, 0.2
        %183 = vst [vmem:[%s134] sm:$0xff] %v180
        %184 = vst [vmem:[%s134 + $0x8] sm:$0xff] %v181
        %185 = vst [vmem:[%s134 + $0x10] sm:$0xff] %v182
        %s186 = sand.u32 %s52, 1
        %s187 = scalar_lea.sflag [#allocation5], %s186
        %s188 = sand.u32 %s52, 1
        %s189 = smul.addr %s188, 24
        %s190 = scalar_lea.vmem [#allocation6], %s189
        // Predicated region
        $region29: #{tpu_custom_call.1} parent=23 // pred_check
          %p191 = pneg %p62
        $region30: #{tpu_custom_call.1} parent=23 // pred_check_branch
          %193 = sbr.rel (%p191) target = $region32
        $region31: #{tpu_custom_call.1} parent=23 // pred_region
          %s195 = ssub.s32 384, 384
          %196 = vsyncadd %s187, %s195
          %s197 = smul.addr %s18, 3
          %s198 = smul.addr %s197, 128
          %s199 = scalar_lea.hbm %s1, %s198
          %s200 = sshll.u32 %s190, 4
          %s201 = int_to_ptr.vmem [resolvable:$true] %s200
          %206 = dma.vmem_to_hbm [thread:$0]  %s201, 384, %s199, %s187, 128, 128, 8
        $region32: #{tpu_custom_call.1} parent=23 // pred_fallthru
          _
      $region24: #{tpu_custom_call.1} parent=5 // pred_fallthru
        _
      %p207 = scmp.le.s32.totalorder 2, %s13
      // Predicated region
      $region33: #{tpu_custom_call.1} parent=5 // pred_check
        %p208 = pneg %p207
      $region34: #{tpu_custom_call.1} parent=5 // pred_check_branch
        %210 = sbr.rel (%p208) target = $region36
      $region35: #{tpu_custom_call.1} parent=5 // pred_region
        %s211 = ssub.s32 %s13, 2
        // Predicated region
        $region37: #{tpu_custom_call.1} parent=35 // pred_check
          %p212 = pneg %p68
        $region38: #{tpu_custom_call.1} parent=35 // pred_check_branch
          %214 = sbr.rel (%p212) target = $region40
        $region39: #{tpu_custom_call.1} parent=35 // pred_region
          %s215 = sand.u32 %s53, 1
          %s216 = scalar_lea.sflag [#allocation5], %s215
          %s217 = sand.u32 %s53, 1
          %s218 = smul.addr %s217, 24
          %s219 = scalar_lea.vmem [#allocation6], %s218
          %220 = dma.done %s216, 384
        $region40: #{tpu_custom_call.1} parent=35 // pred_fallthru
          _
      $region36: #{tpu_custom_call.1} parent=5 // pred_fallthru
        _
    $region6: #{tpu_custom_call.1} parent=1 // loop_footer
      %s17 = sadd.s32 1, %s13
    $region7: #{tpu_custom_call.1} parent=1 // loop_footer_branch
      %12 = sbr.rel target = $region3
    $region8: #{tpu_custom_call.1} parent=1 // loop_exit
      _
    %221 = vsyncpa [#allocation4], 1
    %s222 = scalar_lea.sflag [#allocation4], 1
    %223 = vsyncpa %s222, 1
    %224 = vsyncpa [#allocation5], 1
    %s225 = scalar_lea.sflag [#allocation5], 1
    %226 = vsyncpa %s225, 1

</llo_original>
